<compile_context>
chip_gen: v7x
topology: tpu7x:2x2x1
jax: 0.10.0
libtpu: 0.0.40
codegen_flags: <defaults>
</compile_context>

<pallas_src>
import functools

import jax
import jax.numpy as jnp
from jax import lax
from jax.experimental import pallas as pl
from jax.experimental.pallas import tpu as pltpu


def _round_up(a: int, b: int) -> int:
    return ((a + b - 1) // b) * b


def _sublane_multiple(dtype) -> int:
    # Second-minor block-dim multiple by dtype (sub-32-bit packs along sublanes).
    return {4: 8, 2: 16, 1: 32}.get(jnp.dtype(dtype).itemsize, 8)


def _generation_params():
    """Returns (tile budget bytes, vmem_limit_bytes, min parallel grid steps)."""
    kind = ""
    try:
        kind = jax.devices()[0].device_kind.lower()
    except Exception:
        pass
    if "v7" in kind:
        # 64 MiB physical VMEM; at 3.2 TB/s per-step overhead is the largest
        # fraction of step time -> bigger tiles + guaranteed megacore balance.
        return 10 << 20, 48 << 20, 4
    if "v6" in kind:
        return 8 << 20, 64 << 20, 2
    # v5e and unknown: default scoped VMEM is 16 MiB; keep tiles modest but
    # raise the limit explicitly so 2x double-buffered tiles always fit.
    return 4 << 20, 32 << 20, 1


def _gap_kernel(x_ref, o_ref, acc_ref, *, inv_hw, hw, hw_tile, mask_tail):
    # x_ref: (TB, hw_tile) VMEM tile, o_ref: (TB, 1), acc_ref: (TB, 1) f32 scratch.
    k = pl.program_id(1)

    @pl.when(k == 0)
    def _init():
        acc_ref[...] = jnp.zeros_like(acc_ref)

    x = x_ref[...]
    if mask_tail:
        # Ragged last HW chunk: zero lanes beyond the true extent before summing.
        lane = lax.broadcasted_iota(jnp.int32, x.shape, 1)
        x = jnp.where(k * hw_tile + lane < hw, x, jnp.zeros_like(x))

    # Widening cast fuses per-vreg into the reduction (no f32 tile copy).
    acc_ref[...] += jnp.sum(x, axis=-1, dtype=jnp.float32, keepdims=True)

    @pl.when(k == pl.num_programs(1) - 1)
    def _finalize():
        o_ref[...] = (acc_ref[...] * inv_hw).astype(o_ref.dtype)


def global_avg_pool2d(x: jax.Array) -> jax.Array:
    """Equivalent of GlobalAvgPool2d.forward for NCHW input -> (N, C)."""
    assert x.ndim == 4
    N, C, H, W = x.shape
    NC, HW = N * C, H * W
    xf = x.reshape(NC, HW)  # free reshape (contiguous)

    dsize = jnp.dtype(x.dtype).itemsize
    sub = _sublane_multiple(x.dtype)
    budget, vmem_limit, min_steps = _generation_params()

    # Padded footprint of one tile row (lanes round up to a multiple of 128).
    padded_hw = _round_up(HW, 128)
    row_bytes = padded_hw * dsize

    if sub * row_bytes <= budget:
        # Whole HW fits in one block even at the minimum row count: no K split.
        hw_tile, n_k = HW, 1
        tb = max(sub, (max(1, budget // row_bytes) // sub) * sub)
        if min_steps > 1:
            # Cap tb so the parallel axis has >= min_steps blocks (megacore
            # balance on v7x); best effort when NC is small.
            cap = _round_up(max(1, pl.cdiv(NC, min_steps)), sub)
            tb = max(sub, min(tb, cap))
    else:
        # HW too large for a single (sub, HW) tile: split the reduction axis.
        tb = NC if NC <= sub else sub
        tb_pad = _round_up(tb, sub)
        hw_tile = max(128, (budget // (tb_pad * dsize)) // 128 * 128)
        n_k = pl.cdiv(HW, hw_tile)

    if tb >= NC:
        tb = NC  # full second-minor dim is always a legal block size

    n_i = pl.cdiv(NC, tb)
    rem = HW % hw_tile if n_k > 1 else 0

    cost = pl.CostEstimate(
        flops=NC * HW,  # one add per input element
        transcendentals=0,
        bytes_accessed=NC * HW * dsize + NC * dsize,
    )

    out = pl.pallas_call(
        functools.partial(
            _gap_kernel,
            inv_hw=1.0 / float(HW),
            hw=HW,
            hw_tile=hw_tile,
            mask_tail=rem != 0,
        ),
        out_shape=jax.ShapeDtypeStruct((NC, 1), x.dtype),
        grid=(n_i, n_k),
        in_specs=[pl.BlockSpec((tb, hw_tile), lambda i, k: (i, k))],
        out_specs=pl.BlockSpec((tb, 1), lambda i, k: (i, 0)),
        scratch_shapes=[pltpu.VMEM((tb, 1), jnp.float32)],
        compiler_params=pltpu.CompilerParams(
            dimension_semantics=("parallel", "arbitrary"),
            vmem_limit_bytes=vmem_limit,
        ),
        cost_estimate=cost,
    )(xf)

    # TODO(synk): for very small HW a lane-dense (1, tb) output block (plus a
    # wrapper-side reshape) would cut masked vst traffic further; kept the
    # layout-trivial (tb, 1) store here for robustness. Beating the HBM-read
    # roofline requires fusing this reduction into the producer's epilogue,
    # not further tuning of this standalone kernel.
    return out.reshape(N, C)


def _reference(x: jax.Array) -> jax.Array:
    return jnp.mean(x.astype(jnp.float32), axis=(2, 3)).astype(x.dtype)


if __name__ == "__main__":
    key = jax.random.PRNGKey(0)
    B, C, H, W = 2, 4, 16, 16
    x = jax.random.normal(key, (B, C, H, W), dtype=jnp.float32)

    out = global_avg_pool2d(x)
    out = jax.block_until_ready(out)

    ref = _reference(x)
    assert out.shape == (B, C), out.shape
    assert out.dtype == x.dtype
    assert jnp.allclose(out, ref, rtol=1e-6, atol=1e-6), "mismatch vs reference avg pool"

    print("KERNEL_OK")
</pallas_src>

<mosaic_0001>
module attributes {stable_mosaic.version = 11 : i64} {
  func.func @_gap_kernel(%arg0: i32, %arg1: i32, %arg2: memref<8x256xf32, #tpu.memory_space<vmem>>, %arg3: memref<8x1xf32, #tpu.memory_space<vmem>>, %arg4: memref<8x1xf32, #tpu.memory_space<vmem>>) attributes {dimension_semantics = [#tpu.dimension_semantics<parallel>, #tpu.dimension_semantics<arbitrary>], iteration_bounds = array<i64: 1, 1>, scalar_prefetch = 0 : i64, scratch_operands = 1 : i64, tpu.core_type = #tpu.core_type<tc>, window_params = [{transform_indices = @transform_0, window_bounds = array<i64: 8, 256>}, {transform_indices = @transform_1, window_bounds = array<i64: 8, 1>}]} {
    %c0_i32 = arith.constant 0 : i32
    %0 = arith.cmpi eq, %arg1, %c0_i32 : i32
    %1 = arith.extui %0 : i1 to i32
    %c0_i32_0 = arith.constant 0 : i32
    %2 = arith.cmpi ne, %1, %c0_i32_0 : i32
    scf.if %2 {
      %cst_8 = arith.constant 0.000000e+00 : f32
      %12 = vector.broadcast %cst_8 : f32 to vector<8x1xf32>
      %c0_9 = arith.constant 0 : index
      %c0_10 = arith.constant 0 : index
      %13 = vector.load %arg4[%c0_9, %c0_10] : memref<8x1xf32, #tpu.memory_space<vmem>>, vector<8x1xf32>
      tpu.vector_store %arg4[%c0_9, %c0_10], %12 {strides = array<i32>} : memref<8x1xf32, #tpu.memory_space<vmem>>, vector<8x1xf32>,
    } else {
    }
    %c0 = arith.constant 0 : index
    %c0_1 = arith.constant 0 : index
    %3 = vector.load %arg2[%c0, %c0_1] : memref<8x256xf32, #tpu.memory_space<vmem>>, vector<8x256xf32>
    %c0_2 = arith.constant 0 : index
    %c0_3 = arith.constant 0 : index
    %4 = vector.load %arg4[%c0_2, %c0_3] : memref<8x1xf32, #tpu.memory_space<vmem>>, vector<8x1xf32>
    %cst = arith.constant dense<0.000000e+00> : vector<8xf32>
    %5 = vector.multi_reduction <add>, %3, %cst [1] : vector<8x256xf32> to vector<8xf32>
    %6 = vector.shape_cast %5 : vector<8xf32> to vector<8x1xf32>
    %7 = arith.addf %4, %6 : vector<8x1xf32>
    %c0_4 = arith.constant 0 : index
    %c0_5 = arith.constant 0 : index
    %8 = vector.load %arg4[%c0_4, %c0_5] : memref<8x1xf32, #tpu.memory_space<vmem>>, vector<8x1xf32>
    tpu.vector_store %arg4[%c0_4, %c0_5], %7 {strides = array<i32>} : memref<8x1xf32, #tpu.memory_space<vmem>>, vector<8x1xf32>,
    %c0_i32_6 = arith.constant 0 : i32
    %9 = arith.cmpi eq, %arg1, %c0_i32_6 : i32
    %10 = arith.extui %9 : i1 to i32
    %c0_i32_7 = arith.constant 0 : i32
    %11 = arith.cmpi ne, %10, %c0_i32_7 : i32
    scf.if %11 {
      %c0_8 = arith.constant 0 : index
      %c0_9 = arith.constant 0 : index
      %12 = vector.load %arg4[%c0_8, %c0_9] : memref<8x1xf32, #tpu.memory_space<vmem>>, vector<8x1xf32>
      %cst_10 = arith.constant 3.906250e-03 : f32
      %13 = vector.broadcast %cst_10 : f32 to vector<8x1xf32>
      %14 = arith.mulf %12, %13 : vector<8x1xf32>
      %c0_11 = arith.constant 0 : index
      %c0_12 = arith.constant 0 : index
      %15 = vector.load %arg3[%c0_11, %c0_12] : memref<8x1xf32, #tpu.memory_space<vmem>>, vector<8x1xf32>
      tpu.vector_store %arg3[%c0_11, %c0_12], %14 {strides = array<i32>} : memref<8x1xf32, #tpu.memory_space<vmem>>, vector<8x1xf32>,
    } else {
    }
    return
  }
  func.func @transform_0(%arg0: i32, %arg1: i32) -> (i32, i32) {
    %c0_i32 = arith.constant 0 : i32
    return %arg0, %arg1 : i32, i32
  }
  func.func @transform_1(%arg0: i32, %arg1: i32) -> (i32, i32) {
    %c0_i32 = arith.constant 0 : i32
    %c0_i32_0 = arith.constant 0 : i32
    return %arg0, %c0_i32 : i32, i32
  }
}

</mosaic_0001>

<llo_original>
// kernel: tpu_custom_call.1
$region0: #{tpu_custom_call.1}
  #allocation0 [shape = 'u32[]', space=smem, size = 0x4, offset = 0x4, fixed_abs, tag = 'smem constant byte address 0x4 - core index']
  #allocation1 [shape = 'u32[144,128]{1,0:T(1,128)}', space=vmem, size = 0x12000, scoped, tag = 'internal scratch']
  #allocation2 [shape = 'f32[8,1]{1,0:T(8,128)}', space=vmem, size = 0x1000, scoped, tag = 'scratch operand']
  %s0 = inlined_call_operand.hbm [shape: f32[8,256], index: 0, kind: input, shape index: {}]
  %s1 = inlined_call_operand.vmem [shape: f32[8,1], index: 1, kind: output, shape index: {}]
  %s2 = sld [smem:[#allocation0]]
  $region26: #{tpu_custom_call.1} parent=0
    _
  %s4 = ssub.s32 1, %s2
  %s5 = scalar_select 0, %s4, %s2
  $region1: #{tpu_custom_call.1} parent=0
    #allocation3 [shape = 'u8[8192]{0}', space=vmem, size = 0x2000, scoped, tag = 'input window, operand 0, single buffered']
    #allocation4 [shape = 's32[1]{0}', space=sflag, size = 0x4, scoped, tag = 'scoped memory for tpu_custom_call.1']
    %6 = vsyncpa [#allocation4], 0
    // Predicated region
    $region2: #{tpu_custom_call.1} parent=1 // pred_check
      _
    $region3: #{tpu_custom_call.1} parent=1 // pred_check_branch
      %8 = sbr.rel (0) target = $region5
    $region4: #{tpu_custom_call.1} parent=1 // pred_region
      %s10 = ssub.s32 256, 256
      %11 = vsyncadd [#allocation4], %s10
      %s13 = sshll.u32 [#allocation3], 4
      %s14 = int_to_ptr.vmem [resolvable:$true] %s13
      %16 = dma.hbm_to_vmem [thread:$0]  %s0, 256, %s14, [#allocation4]
    $region5: #{tpu_custom_call.1} parent=1 // pred_fallthru
      _
    // Predicated region
    $region6: #{tpu_custom_call.1} parent=1 // pred_check
      _
    $region7: #{tpu_custom_call.1} parent=1 // pred_check_branch
      %18 = sbr.rel (0) target = $region9
    $region8: #{tpu_custom_call.1} parent=1 // pred_region
      %19 = dma.done [#allocation4], 256
    $region9: #{tpu_custom_call.1} parent=1 // pred_fallthru
      _
    %p20 = scmp.eq.s32.totalorder 0, 0
    // Predicated region
    $region10: #{tpu_custom_call.1} parent=1 // pred_check
      %p21 = pneg %p20
    $region11: #{tpu_custom_call.1} parent=1 // pred_check_branch
      %23 = sbr.rel (%p21) target = $region13
    $region12: #{tpu_custom_call.1} parent=1 // pred_region
      %vm24 = vcmask 7168
      %25 = vst.msk [vmem:[#allocation2] sm:$0xff] %vm24, 0.0
    $region13: #{tpu_custom_call.1} parent=1 // pred_fallthru
      _
    %v26 = vld [vmem:[#allocation3] sm:$0xff]
    %v27 = vld [vmem:[#allocation3 + $0x8] sm:$0xff]
    %v28 = vld [vmem:[#allocation2] sm:$0xff]
    %v29 = vadd.f32 %v26, %v27
    %30 = vadd.xlane.f32.xlu0 %v29
    %v31 = vpop.xlane.xlu0 %30
    %v32 = vadd.f32 %v28, %v31
    %vm33 = vcmask 7168
    %34 = vst.msk [vmem:[#allocation2] sm:$0xff] %vm33, %v32
    // Predicated region
    $region14: #{tpu_custom_call.1} parent=1 // pred_check
      %p35 = pneg %p20
    $region15: #{tpu_custom_call.1} parent=1 // pred_check_branch
      %37 = sbr.rel (%p35) target = $region17
    $region16: #{tpu_custom_call.1} parent=1 // pred_region
      %v38 = vld [vmem:[#allocation2] sm:$0xff]
      %v39 = vmul.f32 %v38, 0.00390625
      %40 = vst.msk [vmem:[%s1] sm:$0xff] %vm33, %v39
    $region17: #{tpu_custom_call.1} parent=1 // pred_fallthru
      _
    // Predicated region
    $region18: #{tpu_custom_call.1} parent=1 // pred_check
      _
    $region19: #{tpu_custom_call.1} parent=1 // pred_check_branch
      %42 = sbr.rel (0) target = $region21
    $region20: #{tpu_custom_call.1} parent=1 // pred_region
      _
    $region21: #{tpu_custom_call.1} parent=1 // pred_fallthru
      _
    // Predicated region
    $region22: #{tpu_custom_call.1} parent=1 // pred_check
      _
    $region23: #{tpu_custom_call.1} parent=1 // pred_check_branch
      %44 = sbr.rel (0) target = $region25
    $region24: #{tpu_custom_call.1} parent=1 // pred_region
      _
    $region25: #{tpu_custom_call.1} parent=1 // pred_fallthru
      _
    %45 = vsyncpa [#allocation4], 1

</llo_original>
